<compile_context>
chip_gen: v6e
topology: v6e:2x2x1
jax: 0.10.0
libtpu: 0.0.40
codegen_flags: <defaults>
</compile_context>

<pallas_src>
import functools

import jax
import jax.numpy as jnp
from jax.experimental import pallas as pl
from jax.experimental.pallas import tpu as pltpu


def meta_embed_kernel(idx_ref, col_ref, tab_ref, out_ref, *, inv_k):
    idx = idx_ref[...]          # (TN, 1)  int32 token ids for this row tile
    col = col_ref[...]          # (1, K*V) int32: column -> vocab id within its table
    # One-hot with value 1/K wherever the column's vocab id matches the token.
    # Each row has exactly K hits (one per table), so the matmul computes
    #   sum_k (1/K) * table_k[idx]  ==  mean_k table_k[idx]
    onehot = jnp.where(col == idx, jnp.float32(inv_k), jnp.float32(0.0))    # (TN, K*V)
    out_ref[...] = jnp.dot(onehot, tab_ref[...],
                           preferred_element_type=jnp.float32)              # (TN, D)


def meta_embedding_avg(x, tables, *, rows_per_step=128):
    """x: int indices, shape (B, L) or (N,).  tables: (K, V, D) stacked embeddings."""
    K, V, D = tables.shape
    orig_shape = x.shape

    flat = x.reshape(-1).astype(jnp.int32)
    N = flat.shape[0]
    TN = rows_per_step
    n_tiles = pl.cdiv(N, TN)
    N_pad = n_tiles * TN

    # Pad rows with a valid index (0); padded rows are dropped after the call.
    idx2d = jnp.pad(flat, (0, N_pad - N)).reshape(N_pad, 1)

    # Layout-only prep in the wrapper (no compute hoisted out of the kernel):
    tab_cat = tables.reshape(K * V, D).astype(jnp.float32)              # (K*V, D)
    col_ids = (jnp.arange(K * V, dtype=jnp.int32) % V).reshape(1, K * V)

    kernel = functools.partial(meta_embed_kernel, inv_k=1.0 / K)

    out = pl.pallas_call(
        kernel,
        out_shape=jax.ShapeDtypeStruct((N_pad, D), jnp.float32),
        grid=(n_tiles,),
        in_specs=[
            pl.BlockSpec((TN, 1), lambda i: (i, 0)),        # row tile of indices
            pl.BlockSpec((1, K * V), lambda i: (0, 0)),     # column->vocab-id row (whole)
            pl.BlockSpec((K * V, D), lambda i: (0, 0)),     # concatenated tables (whole)
        ],
        out_specs=pl.BlockSpec((TN, D), lambda i: (i, 0)),
        compiler_params=pltpu.CompilerParams(dimension_semantics=("parallel",)),
    )(idx2d, col_ids, tab_cat)

    out = out[:N]
    if len(orig_shape) > 1:
        out = out.reshape(*orig_shape, D)
    return out


# ---------------- pure-JAX reference (mirrors the PyTorch forward) ----------------
def reference(x, tables):
    flat = x.reshape(-1)
    # stack([embed_nn(x)], dim=-1) -> (N, D, K); permute(0, 2, 1) -> (N, K, D); mean(-2)
    emb = jnp.stack([tables[k][flat] for k in range(tables.shape[0])], axis=-1)
    emb = jnp.transpose(emb, (0, 2, 1))
    emb = jnp.mean(emb, axis=-2)
    if x.ndim > 1:
        emb = emb.reshape(*x.shape, -1)
    return emb


if __name__ == "__main__":
    K, V, D = 4, 32, 32        # 4 embedding tables, vocab 32, embedding dim 32
    B, L = 2, 8

    key = jax.random.PRNGKey(0)
    k_tab, k_idx = jax.random.split(key)
    tables = jax.random.normal(k_tab, (K, V, D), jnp.float32)
    x = jax.random.randint(k_idx, (B, L), 0, V, dtype=jnp.int32)

    # 2-D input path (reshape_flag == True in the module)
    out = meta_embedding_avg(x, tables)
    jax.block_until_ready(out)
    ref = reference(x, tables)
    assert out.shape == (B, L, D)
    assert jnp.allclose(out, ref, atol=1e-2, rtol=1e-2)

    # 1-D input path (reshape_flag == False in the module)
    x1 = x.reshape(-1)
    out1 = meta_embedding_avg(x1, tables)
    jax.block_until_ready(out1)
    assert out1.shape == (B * L, D)
    assert jnp.allclose(out1, reference(x1, tables), atol=1e-2, rtol=1e-2)

    print("KERNEL_OK")
</pallas_src>

<mosaic_0001>
module attributes {stable_mosaic.version = 11 : i64} {
  func.func @meta_embed_kernel(%arg0: i32, %arg1: memref<128x1xi32, #tpu.memory_space<vmem>>, %arg2: memref<1x128xi32, #tpu.memory_space<vmem>>, %arg3: memref<128x32xf32, #tpu.memory_space<vmem>>, %arg4: memref<128x32xf32, #tpu.memory_space<vmem>>) attributes {dimension_semantics = [#tpu.dimension_semantics<parallel>], iteration_bounds = array<i64: 1>, scalar_prefetch = 0 : i64, scratch_operands = 0 : i64, tpu.core_type = #tpu.core_type<tc>, window_params = [{transform_indices = @transform_0, window_bounds = array<i64: 128, 1>}, {pipeline_mode = #tpu.pipeline_mode<synchronous>, transform_indices = @transform_1, window_bounds = array<i64: 1, 128>}, {pipeline_mode = #tpu.pipeline_mode<synchronous>, transform_indices = @transform_2, window_bounds = array<i64: 128, 32>}, {transform_indices = @transform_3, window_bounds = array<i64: 128, 32>}]} {
    %c0 = arith.constant 0 : index
    %c0_0 = arith.constant 0 : index
    %0 = vector.load %arg1[%c0, %c0_0] : memref<128x1xi32, #tpu.memory_space<vmem>>, vector<128x1xi32>
    %c0_1 = arith.constant 0 : index
    %c0_2 = arith.constant 0 : index
    %1 = vector.load %arg2[%c0_1, %c0_2] : memref<1x128xi32, #tpu.memory_space<vmem>>, vector<1x128xi32>
    %2 = vector.broadcast %1 : vector<1x128xi32> to vector<128x128xi32>
    %3 = vector.broadcast %0 : vector<128x1xi32> to vector<128x128xi32>
    %4 = arith.cmpi eq, %2, %3 : vector<128x128xi32>
    %cst = arith.constant 2.500000e-01 : f32
    %cst_3 = arith.constant 0.000000e+00 : f32
    %5 = vector.broadcast %cst : f32 to vector<128x128xf32>
    %6 = vector.broadcast %cst_3 : f32 to vector<128x128xf32>
    %7 = arith.select %4, %5, %6 : vector<128x128xi1>, vector<128x128xf32>
    %c0_4 = arith.constant 0 : index
    %c0_5 = arith.constant 0 : index
    %8 = vector.load %arg3[%c0_4, %c0_5] : memref<128x32xf32, #tpu.memory_space<vmem>>, vector<128x32xf32>
    %cst_6 = arith.constant dense<0.000000e+00> : vector<128x32xf32>
    %9 = tpu.matmul %7, %8, %cst_6 {dimension_numbers = #tpu.dot_dimension_numbers<[1], [0], [0], [1], [0, 0, 1, 1], [], []>} : vector<128x128xf32>, vector<128x32xf32>, vector<128x32xf32> -> vector<128x32xf32>
    %c0_7 = arith.constant 0 : index
    %c0_8 = arith.constant 0 : index
    %10 = vector.load %arg4[%c0_7, %c0_8] : memref<128x32xf32, #tpu.memory_space<vmem>>, vector<128x32xf32>
    tpu.vector_store %arg4[%c0_7, %c0_8], %9 {strides = array<i32>} : memref<128x32xf32, #tpu.memory_space<vmem>>, vector<128x32xf32>,
    return
  }
  func.func @transform_0(%arg0: i32) -> (i32, i32) {
    %c0_i32 = arith.constant 0 : i32
    %c0_i32_0 = arith.constant 0 : i32
    return %arg0, %c0_i32 : i32, i32
  }
  func.func @transform_1(%arg0: i32) -> (i32, i32) {
    %c0_i32 = arith.constant 0 : i32
    %c0_i32_0 = arith.constant 0 : i32
    %c0_i32_1 = arith.constant 0 : i32
    return %c0_i32, %c0_i32_0 : i32, i32
  }
  func.func @transform_2(%arg0: i32) -> (i32, i32) {
    %c0_i32 = arith.constant 0 : i32
    %c0_i32_0 = arith.constant 0 : i32
    %c0_i32_1 = arith.constant 0 : i32
    return %c0_i32, %c0_i32_0 : i32, i32
  }
  func.func @transform_3(%arg0: i32) -> (i32, i32) {
    %c0_i32 = arith.constant 0 : i32
    %c0_i32_0 = arith.constant 0 : i32
    return %arg0, %c0_i32 : i32, i32
  }
}

</mosaic_0001>

<llo_original>
// kernel: tpu_custom_call.1
$region0: #{tpu_custom_call.1}
  #allocation0 [shape = 'u32[]', space=smem, size = 0x4, offset = 0x4, fixed_abs, tag = 'smem constant byte address 0x4 - core index']
  #allocation1 [shape = 'u32[144,128]{1,0:T(1,128)}', space=vmem, size = 0x12000, scoped, tag = 'internal scratch']
  %s0 = inlined_call_operand.vmem [shape: s32[128,1], index: 0, kind: input, shape index: {}]
  %s1 = inlined_call_operand.vmem [shape: s32[1,128], index: 1, kind: input, shape index: {}]
  %s2 = inlined_call_operand.vmem [shape: f32[128,32], index: 2, kind: input, shape index: {}]
  %s3 = inlined_call_operand.vmem [shape: f32[128,32], index: 3, kind: output, shape index: {}]
  %s4 = sld [smem:[#allocation0]]
  $region22: #{tpu_custom_call.1} parent=0
    _
  %s6 = ssub.s32 1, %s4
  %s7 = scalar_select 0, %s6, %s4
  // Predicated region
  $region2: #{tpu_custom_call.1} parent=0 // pred_check
    _
  $region3: #{tpu_custom_call.1} parent=0 // pred_check_branch
    %9 = sbr.rel (0) target = $region5
  $region4: #{tpu_custom_call.1} parent=0 // pred_region
    _
  $region5: #{tpu_custom_call.1} parent=0 // pred_fallthru
    _
  // Predicated region
  $region6: #{tpu_custom_call.1} parent=0 // pred_check
    _
  $region7: #{tpu_custom_call.1} parent=0 // pred_check_branch
    %11 = sbr.rel (0) target = $region9
  $region8: #{tpu_custom_call.1} parent=0 // pred_region
    _
  $region9: #{tpu_custom_call.1} parent=0 // pred_fallthru
    _
  // Predicated region
  $region10: #{tpu_custom_call.1} parent=0 // pred_check
    _
  $region11: #{tpu_custom_call.1} parent=0 // pred_check_branch
    %13 = sbr.rel (0) target = $region13
  $region12: #{tpu_custom_call.1} parent=0 // pred_region
    _
  $region13: #{tpu_custom_call.1} parent=0 // pred_fallthru
    _
  %v14 = vld [vmem:[%s0] sm:$0xff]
  %v15 = vld [vmem:[%s0 + $0x8] sm:$0xff]
  %v16 = vld [vmem:[%s0 + $0x10] sm:$0xff]
  %v17 = vld [vmem:[%s0 + $0x18] sm:$0xff]
  %v18 = vld [vmem:[%s0 + $0x20] sm:$0xff]
  %v19 = vld [vmem:[%s0 + $0x28] sm:$0xff]
  %v20 = vld [vmem:[%s0 + $0x30] sm:$0xff]
  %v21 = vld [vmem:[%s0 + $0x38] sm:$0xff]
  %v22 = vld [vmem:[%s0 + $0x40] sm:$0xff]
  %v23 = vld [vmem:[%s0 + $0x48] sm:$0xff]
  %v24 = vld [vmem:[%s0 + $0x50] sm:$0xff]
  %v25 = vld [vmem:[%s0 + $0x58] sm:$0xff]
  %v26 = vld [vmem:[%s0 + $0x60] sm:$0xff]
  %v27 = vld [vmem:[%s0 + $0x68] sm:$0xff]
  %v28 = vld [vmem:[%s0 + $0x70] sm:$0xff]
  %v29 = vld [vmem:[%s0 + $0x78] sm:$0xff]
  %v30 = vld [vmem:[%s1] sm:$0x1]
  %v31 = vlaneseq
  %v32 = vshrl.u32 %v31, 7
  %v33 = vsub.s32 0, %v32
  %v34 = vrot.slane %v30, %v33
  %35 = vset.pattern.permute.xlu0 0
  %36 = vperm.xlu0 %35, %v14
  %v37 = vpop.permute.xlu0 %36
  %38 = vset.pattern.permute.xlu0 0
  %39 = vperm.xlu0 %38, %v15
  %v40 = vpop.permute.xlu0 %39
  %41 = vset.pattern.permute.xlu0 0
  %42 = vperm.xlu0 %41, %v16
  %v43 = vpop.permute.xlu0 %42
  %44 = vset.pattern.permute.xlu0 0
  %45 = vperm.xlu0 %44, %v17
  %v46 = vpop.permute.xlu0 %45
  %47 = vset.pattern.permute.xlu0 0
  %48 = vperm.xlu0 %47, %v18
  %v49 = vpop.permute.xlu0 %48
  %50 = vset.pattern.permute.xlu0 0
  %51 = vperm.xlu0 %50, %v19
  %v52 = vpop.permute.xlu0 %51
  %53 = vset.pattern.permute.xlu0 0
  %54 = vperm.xlu0 %53, %v20
  %v55 = vpop.permute.xlu0 %54
  %56 = vset.pattern.permute.xlu0 0
  %57 = vperm.xlu0 %56, %v21
  %v58 = vpop.permute.xlu0 %57
  %59 = vset.pattern.permute.xlu0 0
  %60 = vperm.xlu0 %59, %v22
  %v61 = vpop.permute.xlu0 %60
  %62 = vset.pattern.permute.xlu0 0
  %63 = vperm.xlu0 %62, %v23
  %v64 = vpop.permute.xlu0 %63
  %65 = vset.pattern.permute.xlu0 0
  %66 = vperm.xlu0 %65, %v24
  %v67 = vpop.permute.xlu0 %66
  %68 = vset.pattern.permute.xlu0 0
  %69 = vperm.xlu0 %68, %v25
  %v70 = vpop.permute.xlu0 %69
  %71 = vset.pattern.permute.xlu0 0
  %72 = vperm.xlu0 %71, %v26
  %v73 = vpop.permute.xlu0 %72
  %74 = vset.pattern.permute.xlu0 0
  %75 = vperm.xlu0 %74, %v27
  %v76 = vpop.permute.xlu0 %75
  %77 = vset.pattern.permute.xlu0 0
  %78 = vperm.xlu0 %77, %v28
  %v79 = vpop.permute.xlu0 %78
  %80 = vset.pattern.permute.xlu0 0
  %81 = vperm.xlu0 %80, %v29
  %v82 = vpop.permute.xlu0 %81
  %vm83 = vcmp.eq.s32.totalorder %v34, %v37
  %vm84 = vcmp.eq.s32.totalorder %v34, %v40
  %vm85 = vcmp.eq.s32.totalorder %v34, %v43
  %vm86 = vcmp.eq.s32.totalorder %v34, %v46
  %vm87 = vcmp.eq.s32.totalorder %v34, %v49
  %vm88 = vcmp.eq.s32.totalorder %v34, %v52
  %vm89 = vcmp.eq.s32.totalorder %v34, %v55
  %vm90 = vcmp.eq.s32.totalorder %v34, %v58
  %vm91 = vcmp.eq.s32.totalorder %v34, %v61
  %vm92 = vcmp.eq.s32.totalorder %v34, %v64
  %vm93 = vcmp.eq.s32.totalorder %v34, %v67
  %vm94 = vcmp.eq.s32.totalorder %v34, %v70
  %vm95 = vcmp.eq.s32.totalorder %v34, %v73
  %vm96 = vcmp.eq.s32.totalorder %v34, %v76
  %vm97 = vcmp.eq.s32.totalorder %v34, %v79
  %vm98 = vcmp.eq.s32.totalorder %v34, %v82
  %v99 = vsel %vm83, 0.25, 0.0
  %v100 = vsel %vm84, 0.25, 0.0
  %v101 = vsel %vm85, 0.25, 0.0
  %v102 = vsel %vm86, 0.25, 0.0
  %v103 = vsel %vm87, 0.25, 0.0
  %v104 = vsel %vm88, 0.25, 0.0
  %v105 = vsel %vm89, 0.25, 0.0
  %v106 = vsel %vm90, 0.25, 0.0
  %v107 = vsel %vm91, 0.25, 0.0
  %v108 = vsel %vm92, 0.25, 0.0
  %v109 = vsel %vm93, 0.25, 0.0
  %v110 = vsel %vm94, 0.25, 0.0
  %v111 = vsel %vm95, 0.25, 0.0
  %v112 = vsel %vm96, 0.25, 0.0
  %v113 = vsel %vm97, 0.25, 0.0
  %v114 = vsel %vm98, 0.25, 0.0
  %v115 = vld [vmem:[%s2] sm:$0xff]
  %v116 = vld [vmem:[%s2 + $0x8] sm:$0xff]
  %v117 = vld [vmem:[%s2 + $0x10] sm:$0xff]
  %v118 = vld [vmem:[%s2 + $0x18] sm:$0xff]
  %v119 = vld [vmem:[%s2 + $0x20] sm:$0xff]
  %v120 = vld [vmem:[%s2 + $0x28] sm:$0xff]
  %v121 = vld [vmem:[%s2 + $0x30] sm:$0xff]
  %v122 = vld [vmem:[%s2 + $0x38] sm:$0xff]
  %v123 = vld [vmem:[%s2 + $0x40] sm:$0xff]
  %v124 = vld [vmem:[%s2 + $0x48] sm:$0xff]
  %v125 = vld [vmem:[%s2 + $0x50] sm:$0xff]
  %v126 = vld [vmem:[%s2 + $0x58] sm:$0xff]
  %v127 = vld [vmem:[%s2 + $0x60] sm:$0xff]
  %v128 = vld [vmem:[%s2 + $0x68] sm:$0xff]
  %v129 = vld [vmem:[%s2 + $0x70] sm:$0xff]
  %v130 = vld [vmem:[%s2 + $0x78] sm:$0xff]
  %131 = vmatprep.subr.mxu0 0.0
  %132 = vmatpush1.msra.mxu0 %v130
  %133 = vmatprep.subr.mxu0 0.0
  %134 = vmatpush1.msra.mxu0 %v129
  %135 = vmatprep.subr.mxu0 0.0
  %136 = vmatpush1.msra.mxu0 %v128
  %137 = vmatprep.subr.mxu0 0.0
  %138 = vmatpush1.msra.mxu0 %v127
  %139 = vmatprep.subr.mxu0 0.0
  %140 = vmatpush1.msra.mxu0 %v126
  %141 = vmatprep.subr.mxu0 0.0
  %142 = vmatpush1.msra.mxu0 %v125
  %143 = vmatprep.subr.mxu0 0.0
  %144 = vmatpush1.msra.mxu0 %v124
  %145 = vmatprep.subr.mxu0 0.0
  %146 = vmatpush1.msra.mxu0 %v123
  %147 = vmatprep.subr.mxu0 0.0
  %148 = vmatpush1.msra.mxu0 %v122
  %149 = vmatprep.subr.mxu0 0.0
  %150 = vmatpush1.msra.mxu0 %v121
  %151 = vmatprep.subr.mxu0 0.0
  %152 = vmatpush1.msra.mxu0 %v120
  %153 = vmatprep.subr.mxu0 0.0
  %154 = vmatpush1.msra.mxu0 %v119
  %155 = vmatprep.subr.mxu0 0.0
  %156 = vmatpush1.msra.mxu0 %v118
  %157 = vmatprep.subr.mxu0 0.0
  %158 = vmatpush1.msra.mxu0 %v117
  %159 = vmatprep.subr.mxu0 0.0
  %160 = vmatpush1.msra.mxu0 %v116
  %161 = vmatprep.subr.mxu0 0.0
  %162 = vmatpush1.msra.mxu0 %v115
  %163 = vmatprep.subr.mxu0 0.0
  %164 = vmatpush2.msra.mxu0 0.0
  %165 = vmatprep.subr.mxu0 0.0
  %166 = vmatpush2.msra.mxu0 0.0
  %167 = vmatprep.subr.mxu0 0.0
  %168 = vmatpush2.msra.mxu0 0.0
  %169 = vmatprep.subr.mxu0 0.0
  %170 = vmatpush2.msra.mxu0 0.0
  %171 = vmatprep.subr.mxu0 0.0
  %172 = vmatpush2.msra.mxu0 0.0
  %173 = vmatprep.subr.mxu0 0.0
  %174 = vmatpush2.msra.mxu0 0.0
  %175 = vmatprep.subr.mxu0 0.0
  %176 = vmatpush2.msra.mxu0 0.0
  %177 = vmatprep.subr.mxu0 0.0
  %178 = vmatpush2.msra.mxu0 0.0
  %179 = vmatprep.subr.mxu0 0.0
  %180 = vmatpush2.msra.mxu0 0.0
  %181 = vmatprep.subr.mxu0 0.0
  %182 = vmatpush2.msra.mxu0 0.0
  %183 = vmatprep.subr.mxu0 0.0
  %184 = vmatpush2.msra.mxu0 0.0
  %185 = vmatprep.subr.mxu0 0.0
  %186 = vmatpush2.msra.mxu0 0.0
  %187 = vmatprep.subr.mxu0 0.0
  %188 = vmatpush2.msra.mxu0 0.0
  %189 = vmatprep.subr.mxu0 0.0
  %190 = vmatpush2.msra.mxu0 0.0
  %191 = vmatprep.subr.mxu0 0.0
  %192 = vmatpush2.msra.mxu0 0.0
  %193 = vmatprep.subr.mxu0 0.0
  %194 = vmatpush2.msra.mxu0 0.0
  %195 = vmatprep.mubr.f32.mxu0 0.0
  %196 = vmatmul.mubr.f32.gmra.mxu0 %v99
  %v197 = vpop.f32.mrf.mxu0
  %v198 = vadd.f32 0.0, %v197
  %v199 = vpop.f32.mrf.mxu0
  %200 = vmatprep.mubr.f32.mxu0 0.0
  %201 = vmatmul.mubr.f32.gmra.mxu0 %v100
  %v202 = vpop.f32.mrf.mxu0
  %v203 = vadd.f32 0.0, %v202
  %v204 = vpop.f32.mrf.mxu0
  %205 = vmatprep.mubr.f32.mxu0 0.0
  %206 = vmatmul.mubr.f32.gmra.mxu0 %v101
  %v207 = vpop.f32.mrf.mxu0
  %v208 = vadd.f32 0.0, %v207
  %v209 = vpop.f32.mrf.mxu0
  %210 = vmatprep.mubr.f32.mxu0 0.0
  %211 = vmatmul.mubr.f32.gmra.mxu0 %v102
  %v212 = vpop.f32.mrf.mxu0
  %v213 = vadd.f32 0.0, %v212
  %v214 = vpop.f32.mrf.mxu0
  %215 = vmatprep.mubr.f32.mxu0 0.0
  %216 = vmatmul.mubr.f32.gmra.mxu0 %v103
  %v217 = vpop.f32.mrf.mxu0
  %v218 = vadd.f32 0.0, %v217
  %v219 = vpop.f32.mrf.mxu0
  %220 = vmatprep.mubr.f32.mxu0 0.0
  %221 = vmatmul.mubr.f32.gmra.mxu0 %v104
  %v222 = vpop.f32.mrf.mxu0
  %v223 = vadd.f32 0.0, %v222
  %v224 = vpop.f32.mrf.mxu0
  %225 = vmatprep.mubr.f32.mxu0 0.0
  %226 = vmatmul.mubr.f32.gmra.mxu0 %v105
  %v227 = vpop.f32.mrf.mxu0
  %v228 = vadd.f32 0.0, %v227
  %v229 = vpop.f32.mrf.mxu0
  %230 = vmatprep.mubr.f32.mxu0 0.0
  %231 = vmatmul.mubr.f32.gmra.mxu0 %v106
  %v232 = vpop.f32.mrf.mxu0
  %v233 = vadd.f32 0.0, %v232
  %v234 = vpop.f32.mrf.mxu0
  %235 = vmatprep.mubr.f32.mxu0 0.0
  %236 = vmatmul.mubr.f32.gmra.mxu0 %v107
  %v237 = vpop.f32.mrf.mxu0
  %v238 = vadd.f32 0.0, %v237
  %v239 = vpop.f32.mrf.mxu0
  %240 = vmatprep.mubr.f32.mxu0 0.0
  %241 = vmatmul.mubr.f32.gmra.mxu0 %v108
  %v242 = vpop.f32.mrf.mxu0
  %v243 = vadd.f32 0.0, %v242
  %v244 = vpop.f32.mrf.mxu0
  %245 = vmatprep.mubr.f32.mxu0 0.0
  %246 = vmatmul.mubr.f32.gmra.mxu0 %v109
  %v247 = vpop.f32.mrf.mxu0
  %v248 = vadd.f32 0.0, %v247
  %v249 = vpop.f32.mrf.mxu0
  %250 = vmatprep.mubr.f32.mxu0 0.0
  %251 = vmatmul.mubr.f32.gmra.mxu0 %v110
  %v252 = vpop.f32.mrf.mxu0
  %v253 = vadd.f32 0.0, %v252
  %v254 = vpop.f32.mrf.mxu0
  %255 = vmatprep.mubr.f32.mxu0 0.0
  %256 = vmatmul.mubr.f32.gmra.mxu0 %v111
  %v257 = vpop.f32.mrf.mxu0
  %v258 = vadd.f32 0.0, %v257
  %v259 = vpop.f32.mrf.mxu0
  %260 = vmatprep.mubr.f32.mxu0 0.0
  %261 = vmatmul.mubr.f32.gmra.mxu0 %v112
  %v262 = vpop.f32.mrf.mxu0
  %v263 = vadd.f32 0.0, %v262
  %v264 = vpop.f32.mrf.mxu0
  %265 = vmatprep.mubr.f32.mxu0 0.0
  %266 = vmatmul.mubr.f32.gmra.mxu0 %v113
  %v267 = vpop.f32.mrf.mxu0
  %v268 = vadd.f32 0.0, %v267
  %v269 = vpop.f32.mrf.mxu0
  %270 = vmatprep.mubr.f32.mxu0 0.0
  %271 = vmatmul.mubr.f32.gmra.mxu0 %v114
  %v272 = vpop.f32.mrf.mxu0
  %v273 = vadd.f32 0.0, %v272
  %v274 = vpop.f32.mrf.mxu0
  %275 = vdwg.mxu0
  %vm276 = vcmask 261120
  %277 = vst.msk [vmem:[%s3] sm:$0xff] %vm276, %v198
  %278 = vst.msk [vmem:[%s3 + $0x8] sm:$0xff] %vm276, %v203
  %279 = vst.msk [vmem:[%s3 + $0x10] sm:$0xff] %vm276, %v208
  %280 = vst.msk [vmem:[%s3 + $0x18] sm:$0xff] %vm276, %v213
  %281 = vst.msk [vmem:[%s3 + $0x20] sm:$0xff] %vm276, %v218
  %282 = vst.msk [vmem:[%s3 + $0x28] sm:$0xff] %vm276, %v223
  %283 = vst.msk [vmem:[%s3 + $0x30] sm:$0xff] %vm276, %v228
  %284 = vst.msk [vmem:[%s3 + $0x38] sm:$0xff] %vm276, %v233
  %285 = vst.msk [vmem:[%s3 + $0x40] sm:$0xff] %vm276, %v238
  %286 = vst.msk [vmem:[%s3 + $0x48] sm:$0xff] %vm276, %v243
  %287 = vst.msk [vmem:[%s3 + $0x50] sm:$0xff] %vm276, %v248
  %288 = vst.msk [vmem:[%s3 + $0x58] sm:$0xff] %vm276, %v253
  %289 = vst.msk [vmem:[%s3 + $0x60] sm:$0xff] %vm276, %v258
  %290 = vst.msk [vmem:[%s3 + $0x68] sm:$0xff] %vm276, %v263
  %291 = vst.msk [vmem:[%s3 + $0x70] sm:$0xff] %vm276, %v268
  %292 = vst.msk [vmem:[%s3 + $0x78] sm:$0xff] %vm276, %v273
  // Predicated region
  $region14: #{tpu_custom_call.1} parent=0 // pred_check
    _
  $region15: #{tpu_custom_call.1} parent=0 // pred_check_branch
    %294 = sbr.rel (0) target = $region17
  $region16: #{tpu_custom_call.1} parent=0 // pred_region
    _
  $region17: #{tpu_custom_call.1} parent=0 // pred_fallthru
    _
  // Predicated region
  $region18: #{tpu_custom_call.1} parent=0 // pred_check
    _
  $region19: #{tpu_custom_call.1} parent=0 // pred_check_branch
    %296 = sbr.rel (0) target = $region21
  $region20: #{tpu_custom_call.1} parent=0 // pred_region
    _
  $region21: #{tpu_custom_call.1} parent=0 // pred_fallthru
    _

</llo_original>
